<compile_context>
chip_gen: v7x
topology: tpu7x:2x2x1
jax: 0.10.0
libtpu: 0.0.40
codegen_flags: <defaults>
</compile_context>

<pallas_src>
import math
import functools

import jax
import jax.numpy as jnp
from jax import lax
from jax.experimental import pallas as pl
from jax.experimental.pallas import tpu as pltpu


def _head_kernel(x_ref, w_ref, o_ref, *, bb, T, H):
    # x_ref: (bb, T, C)   -- bb batch elements
    # w_ref: (3, C, H)    -- stacked [Wk, scale*Wq, Wv] (pre-transposed, scale folded)
    # o_ref: (bb, T, H)
    C = x_ref.shape[2]
    x = x_ref[...]

    # Projections: three plain 2-D MXU matmuls (M = bb*T rows each). The leading-dim
    # reshape is a layout no-op (T % 8 == 0, lane dim C untouched) -- no lane slicing.
    x2 = x.reshape(bb * T, C)
    k = jnp.dot(x2, w_ref[0], preferred_element_type=jnp.float32).reshape(bb, T, H)
    q = jnp.dot(x2, w_ref[1], preferred_element_type=jnp.float32).reshape(bb, T, H)
    v = jnp.dot(x2, w_ref[2], preferred_element_type=jnp.float32).reshape(bb, T, H)

    # Attention logits: batched k @ q^T (matches the reference, which intentionally
    # uses k @ q.transpose(-2,-1)). The embed_dim**-0.5 scale is already folded into
    # Wq, so no (bb,T,T) multiply is needed here. dot_general contracts over H
    # directly -- no explicit transpose of q.
    wei = lax.dot_general(
        k, q,
        dimension_numbers=(((2,), (2,)), ((0,), (0,))),
        preferred_element_type=jnp.float32)                              # (bb, T, T)

    # Causal mask from a single (T,T) iota pair, broadcast over the batch dim.
    # -inf is safe because full (T,T) rows are materialized (diagonal never masked).
    row = lax.broadcasted_iota(jnp.int32, (T, T), 0)
    col = lax.broadcasted_iota(jnp.int32, (T, T), 1)
    mask = (col <= row)[None, :, :]                                      # (1, T, T)
    wei = jnp.where(mask, wei, -jnp.inf)

    # Softmax kept in f32 (v5e VPU/EUP have no bf16 path anyway).
    m = jnp.max(wei, axis=-1, keepdims=True)
    p = jnp.exp(wei - m)
    denom = jnp.sum(p, axis=-1, keepdims=True)
    # approx=True lowers to the (otherwise idle) EUP vrcp slot -> effectively free.
    p = p * pl.reciprocal(denom, approx=True)

    # Dropout: identity in eval mode.
    # Attention-weighted values: batched (bb,T,T) @ (bb,T,H). Cast both operands to
    # the compute dtype so a bf16 run stays on the fast bf16 MXU path (no-op for f32).
    mm_dtype = x_ref.dtype
    out = lax.dot_general(
        p.astype(mm_dtype), v.astype(mm_dtype),
        dimension_numbers=(((2,), (1,)), ((0,), (0,))),
        preferred_element_type=jnp.float32)                              # (bb, T, H)

    o_ref[...] = out.astype(o_ref.dtype)


def _pick_block_b(B, T, C, H, in_bytes, out_bytes, budget_bytes):
    """Largest batch-tile that fits the VMEM budget, biased toward grid_b >= 2."""
    def vmem_est(bb):
        # Double-buffered x / out / weight blocks + f32 intermediates (k,q,v, wei, p, out).
        io = (2 * bb * T * C * in_bytes
              + 2 * bb * T * H * out_bytes
              + 2 * 3 * C * H * in_bytes)
        interm = (3 * bb * T * H + 2 * bb * T * T + bb * T * H) * 4
        return io + interm

    divisors = [d for d in range(1, B + 1) if B % d == 0]
    fitting = [d for d in divisors if vmem_est(d) <= budget_bytes] or [1]
    best = max(fitting)
    # Prefer >= 2 grid steps: overlaps the x-block DMA with compute and lets the
    # batch axis shard across the two TensorCores on v7x.
    if best == B and B > 1:
        half = [d for d in fitting if d <= B // 2]
        if half:
            best = max(half)
    return best


def head_forward(x, wk, wq, wv, embed_dim, *, block_b=None, compute_dtype=None):
    """x: (B, T, C); wk/wq/wv: (C, H) (already transposed from PyTorch's (H, C))."""
    B, T, C = x.shape
    H = wk.shape[1]
    scale = float(embed_dim) ** -0.5

    # Fold the softmax scale into the query projection: x @ (scale*Wq) == scale*(x@Wq).
    # Weights stacked on a leading axis so the kernel never lane-slices a fused tile.
    w3 = jnp.stack([wk, wq * scale, wv], axis=0)                         # (3, C, H)

    if compute_dtype is not None:  # bf16 is worthwhile on all generations (MXU inputs);
        x = x.astype(compute_dtype)        # softmax / accumulation stay f32 in-kernel.
        w3 = w3.astype(compute_dtype)

    in_bytes = jnp.dtype(x.dtype).itemsize
    out_bytes = 4  # output kept in f32 below

    if block_b is None:
        # Conservative 16 MiB working-set budget; safe on v5e/v6e/v7x scoped VMEM.
        block_b = _pick_block_b(B, T, C, H, in_bytes, out_bytes, 16 * 1024 * 1024)
    assert B % block_b == 0, "B must be divisible by block_b"
    grid_b = B // block_b

    kernel = functools.partial(_head_kernel, bb=block_b, T=T, H=H)

    out = pl.pallas_call(
        kernel,
        out_shape=jax.ShapeDtypeStruct((B, T, H), jnp.float32),
        grid_spec=pltpu.PrefetchScalarGridSpec(
            num_scalar_prefetch=0,
            grid=(grid_b,),
            in_specs=[
                pl.BlockSpec((block_b, T, C), lambda b: (b, 0, 0)),
                pl.BlockSpec((3, C, H), lambda b: (0, 0, 0)),
            ],
            out_specs=pl.BlockSpec((block_b, T, H), lambda b: (b, 0, 0)),
        ),
        compiler_params=pltpu.CompilerParams(
            # Batch-tile axis is independent -> shards across the 2 TCs on v7x.
            dimension_semantics=("parallel",),
            # Explicit scoped-VMEM limit (v5e's default is only 16 MiB).
            vmem_limit_bytes=32 * 1024 * 1024,
        ),
    )(x, w3)

    return out


if __name__ == "__main__":
    # Small shapes consistent with the module:
    #   embed_dim (C) = 32, sequence_length (T) = 8, batch (B) = 2,
    #   interim_head_size (H) = 16
    B, T, C, H = 2, 8, 32, 16

    key = jax.random.PRNGKey(0)
    kx, kk, kq, kv = jax.random.split(key, 4)

    x = jax.random.normal(kx, (B, T, C), dtype=jnp.float32)

    # Deterministic init of Linear weights (PyTorch shape is (out, in) = (H, C));
    # stored pre-transposed as (C, H) so the kernel computes x @ W.
    bound = 1.0 / math.sqrt(C)
    wk = jax.random.uniform(kk, (C, H), minval=-bound, maxval=bound, dtype=jnp.float32)
    wq = jax.random.uniform(kq, (C, H), minval=-bound, maxval=bound, dtype=jnp.float32)
    wv = jax.random.uniform(kv, (C, H), minval=-bound, maxval=bound, dtype=jnp.float32)

    out = head_forward(x, wk, wq, wv, embed_dim=C)
    out = jax.block_until_ready(out)

    # Pure-JAX reference (same semantics as the PyTorch forward, eval mode).
    k = x @ wk
    q = x @ wq
    v = x @ wv
    wei = (k @ jnp.swapaxes(q, -2, -1)) * (C ** -0.5)
    tril = jnp.tril(jnp.ones((T, T)))
    wei = jnp.where(tril == 0.0, -jnp.inf, wei)
    wei = jax.nn.softmax(wei, axis=-1)
    ref = wei @ v

    assert out.shape == (B, T, H)
    # Tolerance covers the approximate EUP reciprocal used for softmax normalization
    # and the scale folded into Wq; matmuls/softmax are otherwise full f32.
    assert jnp.allclose(out, ref, atol=2e-3, rtol=2e-3)

    print("KERNEL_OK")
</pallas_src>

<mosaic_0001>
module attributes {stable_mosaic.version = 11 : i64} {
  func.func @_head_kernel(%arg0: i32, %arg1: memref<1x8x32xf32, #tpu.memory_space<vmem>>, %arg2: memref<3x32x16xf32, #tpu.memory_space<vmem>>, %arg3: memref<1x8x16xf32, #tpu.memory_space<vmem>>) attributes {dimension_semantics = [#tpu.dimension_semantics<parallel>], iteration_bounds = array<i64: 2>, scalar_prefetch = 0 : i64, scratch_operands = 0 : i64, tpu.core_type = #tpu.core_type<tc>, window_params = [{transform_indices = @transform_0, window_bounds = array<i64: 1, 8, 32>}, {pipeline_mode = #tpu.pipeline_mode<synchronous>, transform_indices = @transform_1, window_bounds = array<i64: 3, 32, 16>}, {transform_indices = @transform_2, window_bounds = array<i64: 1, 8, 16>}]} {
    %c0 = arith.constant 0 : index
    %c0_0 = arith.constant 0 : index
    %c0_1 = arith.constant 0 : index
    %0 = vector.load %arg1[%c0, %c0_0, %c0_1] : memref<1x8x32xf32, #tpu.memory_space<vmem>>, vector<1x8x32xf32>
    %1 = vector.shape_cast %0 : vector<1x8x32xf32> to vector<8x32xf32>
    %c0_2 = arith.constant 0 : index
    %c0_3 = arith.constant 0 : index
    %c0_4 = arith.constant 0 : index
    %2 = vector.load %arg2[%c0_2, %c0_3, %c0_4] : memref<3x32x16xf32, #tpu.memory_space<vmem>>, vector<1x32x16xf32>
    %3 = vector.shape_cast %2 : vector<1x32x16xf32> to vector<32x16xf32>
    %cst = arith.constant dense<0.000000e+00> : vector<8x16xf32>
    %4 = tpu.matmul %1, %3, %cst {dimension_numbers = #tpu.dot_dimension_numbers<[1], [0], [0], [1], [0, 0, 1, 1], [], []>} : vector<8x32xf32>, vector<32x16xf32>, vector<8x16xf32> -> vector<8x16xf32>
    %5 = vector.shape_cast %4 : vector<8x16xf32> to vector<1x8x16xf32>
    %c1 = arith.constant 1 : index
    %c0_5 = arith.constant 0 : index
    %c0_6 = arith.constant 0 : index
    %6 = vector.load %arg2[%c1, %c0_5, %c0_6] : memref<3x32x16xf32, #tpu.memory_space<vmem>>, vector<1x32x16xf32>
    %7 = vector.shape_cast %6 : vector<1x32x16xf32> to vector<32x16xf32>
    %cst_7 = arith.constant dense<0.000000e+00> : vector<8x16xf32>
    %8 = tpu.matmul %1, %7, %cst_7 {dimension_numbers = #tpu.dot_dimension_numbers<[1], [0], [0], [1], [0, 0, 1, 1], [], []>} : vector<8x32xf32>, vector<32x16xf32>, vector<8x16xf32> -> vector<8x16xf32>
    %9 = vector.shape_cast %8 : vector<8x16xf32> to vector<1x8x16xf32>
    %c2 = arith.constant 2 : index
    %c0_8 = arith.constant 0 : index
    %c0_9 = arith.constant 0 : index
    %10 = vector.load %arg2[%c2, %c0_8, %c0_9] : memref<3x32x16xf32, #tpu.memory_space<vmem>>, vector<1x32x16xf32>
    %11 = vector.shape_cast %10 : vector<1x32x16xf32> to vector<32x16xf32>
    %cst_10 = arith.constant dense<0.000000e+00> : vector<8x16xf32>
    %12 = tpu.matmul %1, %11, %cst_10 {dimension_numbers = #tpu.dot_dimension_numbers<[1], [0], [0], [1], [0, 0, 1, 1], [], []>} : vector<8x32xf32>, vector<32x16xf32>, vector<8x16xf32> -> vector<8x16xf32>
    %13 = vector.shape_cast %12 : vector<8x16xf32> to vector<1x8x16xf32>
    %cst_11 = arith.constant dense<0.000000e+00> : vector<1x8x8xf32>
    %14 = tpu.matmul %5, %9, %cst_11 {dimension_numbers = #tpu.dot_dimension_numbers<[2], [2], [1], [1], [0, 0, 0, 1, 1, 1], [0], [0]>} : vector<1x8x16xf32>, vector<1x8x16xf32>, vector<1x8x8xf32> -> vector<1x8x8xf32>
    %15 = tpu.iota {dimensions = array<i32: 0>} : vector<8x8xi32>
    %16 = tpu.iota {dimensions = array<i32: 1>} : vector<8x8xi32>
    %17 = arith.cmpi sle, %16, %15 : vector<8x8xi32>
    %18 = vector.shape_cast %17 : vector<8x8xi1> to vector<1x8x8xi1>
    %cst_12 = arith.constant 0xFF800000 : f32
    %19 = vector.broadcast %cst_12 : f32 to vector<1x8x8xf32>
    %20 = arith.select %18, %14, %19 : vector<1x8x8xi1>, vector<1x8x8xf32>
    %cst_13 = arith.constant dense<0xFF800000> : vector<1x8xf32>
    %21 = vector.multi_reduction <maximumf>, %20, %cst_13 [2] : vector<1x8x8xf32> to vector<1x8xf32>
    %22 = vector.shape_cast %21 : vector<1x8xf32> to vector<1x8x1xf32>
    %23 = vector.broadcast %22 : vector<1x8x1xf32> to vector<1x8x8xf32>
    %24 = arith.subf %20, %23 : vector<1x8x8xf32>
    %25 = math.exp %24 : vector<1x8x8xf32>
    %cst_14 = arith.constant dense<0.000000e+00> : vector<1x8xf32>
    %26 = vector.multi_reduction <add>, %25, %cst_14 [2] : vector<1x8x8xf32> to vector<1x8xf32>
    %27 = vector.shape_cast %26 : vector<1x8xf32> to vector<1x8x1xf32>
    %28 = tpu.reciprocal %27 {approx = true} : vector<1x8x1xf32> -> vector<1x8x1xf32>
    %29 = vector.broadcast %28 : vector<1x8x1xf32> to vector<1x8x8xf32>
    %30 = arith.mulf %25, %29 : vector<1x8x8xf32>
    %cst_15 = arith.constant dense<0.000000e+00> : vector<1x8x16xf32>
    %31 = tpu.matmul %30, %13, %cst_15 {dimension_numbers = #tpu.dot_dimension_numbers<[2], [1], [1], [2], [0, 0, 0, 1, 1, 2], [0], [0]>} : vector<1x8x8xf32>, vector<1x8x16xf32>, vector<1x8x16xf32> -> vector<1x8x16xf32>
    %c0_16 = arith.constant 0 : index
    %c0_17 = arith.constant 0 : index
    %c0_18 = arith.constant 0 : index
    %32 = vector.load %arg3[%c0_16, %c0_17, %c0_18] : memref<1x8x16xf32, #tpu.memory_space<vmem>>, vector<1x8x16xf32>
    tpu.vector_store %arg3[%c0_16, %c0_17, %c0_18], %31 {strides = array<i32>} : memref<1x8x16xf32, #tpu.memory_space<vmem>>, vector<1x8x16xf32>,
    return
  }
  func.func @transform_0(%arg0: i32) -> (i32, i32, i32) {
    %c0_i32 = arith.constant 0 : i32
    %c0_i32_0 = arith.constant 0 : i32
    %c0_i32_1 = arith.constant 0 : i32
    return %arg0, %c0_i32, %c0_i32_0 : i32, i32, i32
  }
  func.func @transform_1(%arg0: i32) -> (i32, i32, i32) {
    %c0_i32 = arith.constant 0 : i32
    %c0_i32_0 = arith.constant 0 : i32
    %c0_i32_1 = arith.constant 0 : i32
    %c0_i32_2 = arith.constant 0 : i32
    return %c0_i32, %c0_i32_0, %c0_i32_1 : i32, i32, i32
  }
  func.func @transform_2(%arg0: i32) -> (i32, i32, i32) {
    %c0_i32 = arith.constant 0 : i32
    %c0_i32_0 = arith.constant 0 : i32
    %c0_i32_1 = arith.constant 0 : i32
    return %arg0, %c0_i32, %c0_i32_0 : i32, i32, i32
  }
}

</mosaic_0001>

<llo_original>
// kernel: tpu_custom_call.1
$region0: #{tpu_custom_call.1}
  #allocation0 [shape = 'u32[]', space=smem, size = 0x4, offset = 0x4, fixed_abs, tag = 'smem constant byte address 0x4 - core index']
  #allocation1 [shape = 'u32[144,128]{1,0:T(1,128)}', space=vmem, size = 0x12000, scoped, tag = 'internal scratch']
  %s0 = inlined_call_operand.vmem [shape: f32[2,8,32], index: 0, kind: input, shape index: {}]
  %s1 = inlined_call_operand.vmem [shape: f32[3,32,16], index: 1, kind: input, shape index: {}]
  %s2 = inlined_call_operand.hbm [shape: f32[2,8,16], index: 2, kind: output, shape index: {}]
  %s3 = sld [smem:[#allocation0]]
  $region41: #{tpu_custom_call.1} parent=0
    _
  %s5 = ssub.s32 1, %s3
  %s6 = scalar_select 0, %s5, %s3
  $region1: #{tpu_custom_call.1} parent=0
    #allocation2 [shape = 'u8[8192]{0}', space=vmem, size = 0x2000, scoped, tag = 'output window, operand 0']
    #allocation3 [shape = 's32[2]{0}', space=sflag, size = 0x8, scoped, tag = 'scoped memory for tpu_custom_call.1']
    %7 = vsyncpa [#allocation3], 0
    %s8 = scalar_lea.sflag [#allocation3], 1
    %9 = vsyncpa %s8, 0
    loop: start=0, step=1, limit=4
    $region2: #{tpu_custom_call.1} parent=1 // loop_pre_header
      _
    $region3: #{tpu_custom_call.1} parent=1 // loop_header
      %s11 = sphi 0, %s15
      %p12 = scmp.ge.s32.totalorder %s11, 4
      %s21 = sphi 0, %s23
      %s24 = sphi 0, %s21
      %s25 = sphi 0, %s24
      %s41 = sphi 0, %s25
      %s45 = sphi 0, %s45
      %s47 = sphi 0, %s45
      %s48 = sphi 0, %s47
      %s62 = sphi 0, %s48
      %s68 = sphi 0, %s70
      %s71 = sphi 0, %s68
      %s72 = sphi 0, %s71
      %s88 = sphi 0, %s72
    $region4: #{tpu_custom_call.1} parent=1 // loop_header_branch
      %14 = sbr.rel (%p12) target = $region8
    $region5: #{tpu_custom_call.1} parent=1 // loop_body
      %s16 = ssub.s32 %s11, 1
      %s17 = ssub.s32 %s11, 2
      %s18 = sadd.s32 %s11, 1
      %s19 = ssub.s32 %s11, %s18
      %p20 = scmp.eq.s32.totalorder %s19, 0
      %s22 = sadd.s32 %s21, 1
      %s23 = scalar_select %p20, %s21, %s22
      %p26 = pneg %p20
      %p27 = scmp.eq.s32.totalorder %s11, 1
      %p28 = por %p26, %p27
      %p29 = scmp.ne.s32.totalorder %s21, %s24
      %p30 = scmp.eq.s32.totalorder %s11, 0
      %p31 = por %p29, %p30
      %p32 = scmp.ne.s32.totalorder %s21, %s24
      %p33 = scmp.eq.s32.totalorder %s16, 1
      %p34 = por %p32, %p33
      %p35 = scmp.ne.s32.totalorder %s24, %s25
      %p36 = scmp.eq.s32.totalorder %s16, 0
      %p37 = por %p35, %p36
      %p38 = scmp.ne.s32.totalorder %s24, %s25
      %p39 = scmp.eq.s32.totalorder %s17, 1
      %p40 = por %p38, %p39
      %p42 = scmp.ne.s32.totalorder %s25, %s41
      %p43 = scmp.eq.s32.totalorder %s17, 0
      %p44 = por %p42, %p43
      %s46 = sadd.s32 %s45, 1
      %p49 = scmp.eq.s32.totalorder %s11, 1
      %p50 = scmp.ne.s32.totalorder %s45, %s47
      %p51 = scmp.eq.s32.totalorder %s11, 0
      %p52 = por %p50, %p51
      %p53 = scmp.ne.s32.totalorder %s45, %s47
      %p54 = scmp.eq.s32.totalorder %s16, 1
      %p55 = por %p53, %p54
      %p56 = scmp.ne.s32.totalorder %s47, %s48
      %p57 = scmp.eq.s32.totalorder %s16, 0
      %p58 = por %p56, %p57
      %p59 = scmp.ne.s32.totalorder %s47, %s48
      %p60 = scmp.eq.s32.totalorder %s17, 1
      %p61 = por %p59, %p60
      %p63 = scmp.ne.s32.totalorder %s48, %s62
      %p64 = scmp.eq.s32.totalorder %s17, 0
      %p65 = por %p63, %p64
      %s66 = ssub.s32 %s11, %s18
      %p67 = scmp.eq.s32.totalorder %s66, 0
      %s69 = sadd.s32 %s68, 1
      %s70 = scalar_select %p67, %s68, %s69
      %p73 = pneg %p67
      %p74 = scmp.eq.s32.totalorder %s11, 1
      %p75 = por %p73, %p74
      %p76 = scmp.ne.s32.totalorder %s68, %s71
      %p77 = scmp.eq.s32.totalorder %s11, 0
      %p78 = por %p76, %p77
      %p79 = scmp.ne.s32.totalorder %s68, %s71
      %p80 = scmp.eq.s32.totalorder %s16, 1
      %p81 = por %p79, %p80
      %p82 = scmp.ne.s32.totalorder %s71, %s72
      %p83 = scmp.eq.s32.totalorder %s16, 0
      %p84 = por %p82, %p83
      %p85 = scmp.ne.s32.totalorder %s71, %s72
      %p86 = scmp.eq.s32.totalorder %s17, 1
      %p87 = por %p85, %p86
      %p89 = scmp.ne.s32.totalorder %s72, %s88
      %p90 = scmp.eq.s32.totalorder %s17, 0
      %p91 = por %p89, %p90
      %p92 = scmp.le.s32.totalorder 1, %s11
      %p93 = scmp.lt.s32.totalorder %s11, 3
      %p94 = pnand %p92, %p93
      %p95 = pneg %p94
      // Predicated region
      $region9: #{tpu_custom_call.1} parent=5 // pred_check
        _
      $region10: #{tpu_custom_call.1} parent=5 // pred_check_branch
        %97 = sbr.rel (%p94) target = $region12
      $region11: #{tpu_custom_call.1} parent=5 // pred_region
        %s98 = ssub.s32 %s11, 1
        // Predicated region
        $region13: #{tpu_custom_call.1} parent=11 // pred_check
          %p99 = pneg %p58
        $region14: #{tpu_custom_call.1} parent=11 // pred_check_branch
          %101 = sbr.rel (%p99) target = $region16
        $region15: #{tpu_custom_call.1} parent=11 // pred_region
          _
        $region16: #{tpu_custom_call.1} parent=11 // pred_fallthru
          _
      $region12: #{tpu_custom_call.1} parent=5 // pred_fallthru
        _
      %p102 = scmp.lt.s32.totalorder %s11, 2
      // Predicated region
      $region17: #{tpu_custom_call.1} parent=5 // pred_check
        %p103 = pneg %p102
      $region18: #{tpu_custom_call.1} parent=5 // pred_check_branch
        %105 = sbr.rel (%p103) target = $region20
      $region19: #{tpu_custom_call.1} parent=5 // pred_region
        // Predicated region
        $region21: #{tpu_custom_call.1} parent=19 // pred_check
          %p106 = pneg %p31
        $region22: #{tpu_custom_call.1} parent=19 // pred_check_branch
          %108 = sbr.rel (%p106) target = $region24
        $region23: #{tpu_custom_call.1} parent=19 // pred_region
          %p109 = scmp.lt.s32.totalorder %s11, 1
          %s110 = scalar_select %p109, %s11, 1
          %s111 = smul.addr %s110, 8
          %s112 = scalar_lea.vmem %s0, %s111
        $region24: #{tpu_custom_call.1} parent=19 // pred_fallthru
          _
      $region20: #{tpu_custom_call.1} parent=5 // pred_fallthru
        _
      %p113 = scmp.le.s32.totalorder 1, %s11
      %p114 = scmp.lt.s32.totalorder %s11, 3
      %p115 = pnand %p113, %p114
      %p116 = pneg %p115
      // Predicated region
      $region25: #{tpu_custom_call.1} parent=5 // pred_check
        _
      $region26: #{tpu_custom_call.1} parent=5 // pred_check_branch
        %118 = sbr.rel (%p115) target = $region28
      $region27: #{tpu_custom_call.1} parent=5 // pred_region
        %s119 = ssub.s32 %s11, 1
        %p120 = scmp.lt.s32.totalorder %s16, 1
        %s121 = scalar_select %p120, %s16, 1
        %s122 = smul.addr %s121, 8
        %s123 = scalar_lea.vmem %s0, %s122
        %p124 = pneg %p37
        %p125 = pneg %p34
        %p126 = pneg %p58
        %p127 = pneg %p55
        %p128 = pneg %p84
        %p129 = pneg %p81
        %s130 = sand.u32 %s71, 1
        %s131 = scalar_lea.sflag [#allocation3], %s130
        %s132 = sand.u32 %s71, 1
        %s133 = smul.addr %s132, 8
        %s134 = scalar_lea.vmem [#allocation2], %s133
        %p135 = scmp.lt.s32.totalorder %s16, 1
        %s136 = scalar_select %p135, %s16, 1
        %s137 = smul.addr %s136, 8
        %s138 = scalar_lea.vmem %s0, %s137
        %v139 = vld [vmem:[%s138] sm:$0xff]
        %v140 = vld [vmem:[%s1] sm:$0xff]
        %v141 = vld [vmem:[%s1 + $0x8] sm:$0xff]
        %v142 = vld [vmem:[%s1 + $0x10] sm:$0xff]
        %v143 = vld [vmem:[%s1 + $0x18] sm:$0xff]
        %vm144 = vcmask 261120
        %v146 = vsel %vm144, %v139, 0
        %148 = vmatprep.subr.mxu0 0.0
        %149 = vmatpush1.msra.mxu0 %v140
        %150 = vmatprep.subr.mxu0 0.0
        %151 = vmatpush1.msra.mxu0 %v141
        %152 = vmatprep.subr.mxu0 0.0
        %153 = vmatpush1.msra.mxu0 %v142
        %154 = vmatprep.subr.mxu0 0.0
        %155 = vmatpush1.msra.mxu0 %v143
        %156 = vmatprep.subr.mxu0 0.0
        %157 = vmatpush1.msra.mxu0 0.0
        %158 = vmatprep.subr.mxu0 0.0
        %159 = vmatpush1.msra.mxu0 0.0
        %160 = vmatprep.subr.mxu0 0.0
        %161 = vmatpush1.msra.mxu0 0.0
        %162 = vmatprep.subr.mxu0 0.0
        %163 = vmatpush1.msra.mxu0 0.0
        %164 = vmatprep.subr.mxu0 0.0
        %165 = vmatpush1.msra.mxu0 0.0
        %166 = vmatprep.subr.mxu0 0.0
        %167 = vmatpush1.msra.mxu0 0.0
        %168 = vmatprep.subr.mxu0 0.0
        %169 = vmatpush1.msra.mxu0 0.0
        %170 = vmatprep.subr.mxu0 0.0
        %171 = vmatpush1.msra.mxu0 0.0
        %172 = vmatprep.subr.mxu0 0.0
        %173 = vmatpush1.msra.mxu0 0.0
        %174 = vmatprep.subr.mxu0 0.0
        %175 = vmatpush1.msra.mxu0 0.0
        %176 = vmatprep.subr.mxu0 0.0
        %177 = vmatpush1.msra.mxu0 0.0
        %178 = vmatprep.subr.mxu0 0.0
        %179 = vmatpush1.msra.mxu0 0.0
        %180 = vmatprep.subr.mxu0 0.0
        %181 = vmatpush1.msra.mxu0 0.0
        %182 = vmatprep.subr.mxu0 0.0
        %183 = vmatpush1.msra.mxu0 0.0
        %184 = vmatprep.subr.mxu0 0.0
        %185 = vmatpush1.msra.mxu0 0.0
        %186 = vmatprep.subr.mxu0 0.0
        %187 = vmatpush1.msra.mxu0 0.0
        %188 = vmatprep.subr.mxu0 0.0
        %189 = vmatpush1.msra.mxu0 0.0
        %190 = vmatprep.subr.mxu0 0.0
        %191 = vmatpush1.msra.mxu0 0.0
        %192 = vmatprep.subr.mxu0 0.0
        %193 = vmatpush1.msra.mxu0 0.0
        %194 = vmatprep.subr.mxu0 0.0
        %195 = vmatpush1.msra.mxu0 0.0
        %196 = vmatprep.subr.mxu0 0.0
        %197 = vmatpush1.msra.mxu0 0.0
        %198 = vmatprep.subr.mxu0 0.0
        %199 = vmatpush1.msra.mxu0 0.0
        %200 = vmatprep.subr.mxu0 0.0
        %201 = vmatpush1.msra.mxu0 0.0
        %202 = vmatprep.subr.mxu0 0.0
        %203 = vmatpush1.msra.mxu0 0.0
        %204 = vmatprep.subr.mxu0 0.0
        %205 = vmatpush1.msra.mxu0 0.0
        %206 = vmatprep.subr.mxu0 0.0
        %207 = vmatpush1.msra.mxu0 0.0
        %208 = vmatprep.subr.mxu0 0.0
        %209 = vmatpush1.msra.mxu0 0.0
        %210 = vmatprep.subr.mxu0 0.0
        %211 = vmatpush1.msra.mxu0 0.0
        %212 = vmatprep.mubr.f32.mxu0 0.0
        %213 = vmatmul.mubr.f32.gmra.mrb[0].mxu0 %v146
        %v214 = vpop.f32.mrb[0].mxu0
        %v215 = vadd.f32 0.0, %v214
        %v216 = vpop.f32.mrb[0].mxu0
        %217 = vdwg.mxu0
        %s218 = scalar_lea.vmem %s1, 32
        %v219 = vld [vmem:[%s218] sm:$0xff]
        %v220 = vld [vmem:[%s218 + $0x8] sm:$0xff]
        %v221 = vld [vmem:[%s218 + $0x10] sm:$0xff]
        %v222 = vld [vmem:[%s218 + $0x18] sm:$0xff]
        %223 = vmatprep.subr.mxu0 0.0
        %224 = vmatpush1.msra.mxu0 %v219
        %225 = vmatprep.subr.mxu0 0.0
        %226 = vmatpush1.msra.mxu0 %v220
        %227 = vmatprep.subr.mxu0 0.0
        %228 = vmatpush1.msra.mxu0 %v221
        %229 = vmatprep.subr.mxu0 0.0
        %230 = vmatpush1.msra.mxu0 %v222
        %231 = vmatprep.subr.mxu0 0.0
        %232 = vmatpush1.msra.mxu0 0.0
        %233 = vmatprep.subr.mxu0 0.0
        %234 = vmatpush1.msra.mxu0 0.0
        %235 = vmatprep.subr.mxu0 0.0
        %236 = vmatpush1.msra.mxu0 0.0
        %237 = vmatprep.subr.mxu0 0.0
        %238 = vmatpush1.msra.mxu0 0.0
        %239 = vmatprep.subr.mxu0 0.0
        %240 = vmatpush1.msra.mxu0 0.0
        %241 = vmatprep.subr.mxu0 0.0
        %242 = vmatpush1.msra.mxu0 0.0
        %243 = vmatprep.subr.mxu0 0.0
        %244 = vmatpush1.msra.mxu0 0.0
        %245 = vmatprep.subr.mxu0 0.0
        %246 = vmatpush1.msra.mxu0 0.0
        %247 = vmatprep.subr.mxu0 0.0
        %248 = vmatpush1.msra.mxu0 0.0
        %249 = vmatprep.subr.mxu0 0.0
        %250 = vmatpush1.msra.mxu0 0.0
        %251 = vmatprep.subr.mxu0 0.0
        %252 = vmatpush1.msra.mxu0 0.0
        %253 = vmatprep.subr.mxu0 0.0
        %254 = vmatpush1.msra.mxu0 0.0
        %255 = vmatprep.subr.mxu0 0.0
        %256 = vmatpush1.msra.mxu0 0.0
        %257 = vmatprep.subr.mxu0 0.0
        %258 = vmatpush1.msra.mxu0 0.0
        %259 = vmatprep.subr.mxu0 0.0
        %260 = vmatpush1.msra.mxu0 0.0
        %261 = vmatprep.subr.mxu0 0.0
        %262 = vmatpush1.msra.mxu0 0.0
        %263 = vmatprep.subr.mxu0 0.0
        %264 = vmatpush1.msra.mxu0 0.0
        %265 = vmatprep.subr.mxu0 0.0
        %266 = vmatpush1.msra.mxu0 0.0
        %267 = vmatprep.subr.mxu0 0.0
        %268 = vmatpush1.msra.mxu0 0.0
        %269 = vmatprep.subr.mxu0 0.0
        %270 = vmatpush1.msra.mxu0 0.0
        %271 = vmatprep.subr.mxu0 0.0
        %272 = vmatpush1.msra.mxu0 0.0
        %273 = vmatprep.subr.mxu0 0.0
        %274 = vmatpush1.msra.mxu0 0.0
        %275 = vmatprep.subr.mxu0 0.0
        %276 = vmatpush1.msra.mxu0 0.0
        %277 = vmatprep.subr.mxu0 0.0
        %278 = vmatpush1.msra.mxu0 0.0
        %279 = vmatprep.subr.mxu0 0.0
        %280 = vmatpush1.msra.mxu0 0.0
        %281 = vmatprep.subr.mxu0 0.0
        %282 = vmatpush1.msra.mxu0 0.0
        %283 = vmatprep.subr.mxu0 0.0
        %284 = vmatpush1.msra.mxu0 0.0
        %285 = vmatprep.subr.mxu0 0.0
        %286 = vmatpush1.msra.mxu0 0.0
        %287 = vmatprep.mubr.f32.mxu0 0.0
        %288 = vmatmul.mubr.f32.gmra.mrb[0].mxu0 %v146
        %v289 = vpop.f32.mrb[0].mxu0
        %v290 = vadd.f32 0.0, %v289
        %v291 = vpop.f32.mrb[0].mxu0
        %292 = vdwg.mxu0
        %s293 = scalar_lea.vmem %s1, 64
        %v294 = vld [vmem:[%s293] sm:$0xff]
        %v295 = vld [vmem:[%s293 + $0x8] sm:$0xff]
        %v296 = vld [vmem:[%s293 + $0x10] sm:$0xff]
        %v297 = vld [vmem:[%s293 + $0x18] sm:$0xff]
        %298 = vmatprep.subr.mxu0 0.0
        %299 = vmatpush1.msra.mxu0 %v294
        %300 = vmatprep.subr.mxu0 0.0
        %301 = vmatpush1.msra.mxu0 %v295
        %302 = vmatprep.subr.mxu0 0.0
        %303 = vmatpush1.msra.mxu0 %v296
        %304 = vmatprep.subr.mxu0 0.0
        %305 = vmatpush1.msra.mxu0 %v297
        %306 = vmatprep.subr.mxu0 0.0
        %307 = vmatpush1.msra.mxu0 0.0
        %308 = vmatprep.subr.mxu0 0.0
        %309 = vmatpush1.msra.mxu0 0.0
        %310 = vmatprep.subr.mxu0 0.0
        %311 = vmatpush1.msra.mxu0 0.0
        %312 = vmatprep.subr.mxu0 0.0
        %313 = vmatpush1.msra.mxu0 0.0
        %314 = vmatprep.subr.mxu0 0.0
        %315 = vmatpush1.msra.mxu0 0.0
        %316 = vmatprep.subr.mxu0 0.0
        %317 = vmatpush1.msra.mxu0 0.0
        %318 = vmatprep.subr.mxu0 0.0
        %319 = vmatpush1.msra.mxu0 0.0
        %320 = vmatprep.subr.mxu0 0.0
        %321 = vmatpush1.msra.mxu0 0.0
        %322 = vmatprep.subr.mxu0 0.0
        %323 = vmatpush1.msra.mxu0 0.0
        %324 = vmatprep.subr.mxu0 0.0
        %325 = vmatpush1.msra.mxu0 0.0
        %326 = vmatprep.subr.mxu0 0.0
        %327 = vmatpush1.msra.mxu0 0.0
        %328 = vmatprep.subr.mxu0 0.0
        %329 = vmatpush1.msra.mxu0 0.0
        %330 = vmatprep.subr.mxu0 0.0
        %331 = vmatpush1.msra.mxu0 0.0
        %332 = vmatprep.subr.mxu0 0.0
        %333 = vmatpush1.msra.mxu0 0.0
        %334 = vmatprep.subr.mxu0 0.0
        %335 = vmatpush1.msra.mxu0 0.0
        %336 = vmatprep.subr.mxu0 0.0
        %337 = vmatpush1.msra.mxu0 0.0
        %338 = vmatprep.subr.mxu0 0.0
        %339 = vmatpush1.msra.mxu0 0.0
        %340 = vmatprep.subr.mxu0 0.0
        %341 = vmatpush1.msra.mxu0 0.0
        %342 = vmatprep.subr.mxu0 0.0
        %343 = vmatpush1.msra.mxu0 0.0
        %344 = vmatprep.subr.mxu0 0.0
        %345 = vmatpush1.msra.mxu0 0.0
        %346 = vmatprep.subr.mxu0 0.0
        %347 = vmatpush1.msra.mxu0 0.0
        %348 = vmatprep.subr.mxu0 0.0
        %349 = vmatpush1.msra.mxu0 0.0
        %350 = vmatprep.subr.mxu0 0.0
        %351 = vmatpush1.msra.mxu0 0.0
        %352 = vmatprep.subr.mxu0 0.0
        %353 = vmatpush1.msra.mxu0 0.0
        %354 = vmatprep.subr.mxu0 0.0
        %355 = vmatpush1.msra.mxu0 0.0
        %356 = vmatprep.subr.mxu0 0.0
        %357 = vmatpush1.msra.mxu0 0.0
        %358 = vmatprep.subr.mxu0 0.0
        %359 = vmatpush1.msra.mxu0 0.0
        %360 = vmatprep.subr.mxu0 0.0
        %361 = vmatpush1.msra.mxu0 0.0
        %362 = vmatprep.mubr.f32.mxu0 0.0
        %363 = vmatmul.mubr.f32.gmra.mrb[0].mxu0 %v146
        %v364 = vpop.f32.mrb[0].mxu0
        %v365 = vadd.f32 0.0, %v364
        %v366 = vpop.f32.mrb[0].mxu0
        %367 = vdwg.mxu0
        %vm368 = vcmask 130048
        %v370 = vsel %vm368, %v215, 0
        %v373 = vsel %vm368, %v290, 0
        %375 = vmatprep.subr.mxu0 0.0
        %376 = vmatpush1.xpose.msra.mxu0 %v373
        %377 = vmatprep.subr.mxu0 0.0
        %378 = vmatpush1.xpose.msra.mxu0 0.0
        %379 = vmatprep.subr.mxu0 0.0
        %380 = vmatpush1.xpose.msra.mxu0 0.0
        %381 = vmatprep.subr.mxu0 0.0
        %382 = vmatpush1.xpose.msra.mxu0 0.0
        %383 = vmatprep.subr.mxu0 0.0
        %384 = vmatpush1.xpose.msra.mxu0 0.0
        %385 = vmatprep.subr.mxu0 0.0
        %386 = vmatpush1.xpose.msra.mxu0 0.0
        %387 = vmatprep.subr.mxu0 0.0
        %388 = vmatpush1.xpose.msra.mxu0 0.0
        %389 = vmatprep.subr.mxu0 0.0
        %390 = vmatpush1.xpose.msra.mxu0 0.0
        %391 = vmatprep.subr.mxu0 0.0
        %392 = vmatpush1.xpose.msra.mxu0 0.0
        %393 = vmatprep.subr.mxu0 0.0
        %394 = vmatpush1.xpose.msra.mxu0 0.0
        %395 = vmatprep.subr.mxu0 0.0
        %396 = vmatpush1.xpose.msra.mxu0 0.0
        %397 = vmatprep.subr.mxu0 0.0
        %398 = vmatpush1.xpose.msra.mxu0 0.0
        %399 = vmatprep.subr.mxu0 0.0
        %400 = vmatpush1.xpose.msra.mxu0 0.0
        %401 = vmatprep.subr.mxu0 0.0
        %402 = vmatpush1.xpose.msra.mxu0 0.0
        %403 = vmatprep.subr.mxu0 0.0
        %404 = vmatpush1.xpose.msra.mxu0 0.0
        %405 = vmatprep.subr.mxu0 0.0
        %406 = vmatpush1.xpose.msra.mxu0 0.0
        %407 = vmatprep.subr.mxu0 0.0
        %408 = vmatpush1.xpose.msra.mxu0 0.0
        %409 = vmatprep.subr.mxu0 0.0
        %410 = vmatpush1.xpose.msra.mxu0 0.0
        %411 = vmatprep.subr.mxu0 0.0
        %412 = vmatpush1.xpose.msra.mxu0 0.0
        %413 = vmatprep.subr.mxu0 0.0
        %414 = vmatpush1.xpose.msra.mxu0 0.0
        %415 = vmatprep.subr.mxu0 0.0
        %416 = vmatpush1.xpose.msra.mxu0 0.0
        %417 = vmatprep.subr.mxu0 0.0
        %418 = vmatpush1.xpose.msra.mxu0 0.0
        %419 = vmatprep.subr.mxu0 0.0
        %420 = vmatpush1.xpose.msra.mxu0 0.0
        %421 = vmatprep.subr.mxu0 0.0
        %422 = vmatpush1.xpose.msra.mxu0 0.0
        %423 = vmatprep.subr.mxu0 0.0
        %424 = vmatpush1.xpose.msra.mxu0 0.0
        %425 = vmatprep.subr.mxu0 0.0
        %426 = vmatpush1.xpose.msra.mxu0 0.0
        %427 = vmatprep.subr.mxu0 0.0
        %428 = vmatpush1.xpose.msra.mxu0 0.0
        %429 = vmatprep.subr.mxu0 0.0
        %430 = vmatpush1.xpose.msra.mxu0 0.0
        %431 = vmatprep.subr.mxu0 0.0
        %432 = vmatpush1.xpose.msra.mxu0 0.0
        %433 = vmatprep.subr.mxu0 0.0
        %434 = vmatpush1.xpose.msra.mxu0 0.0
        %435 = vmatprep.subr.mxu0 0.0
        %436 = vmatpush1.xpose.msra.mxu0 0.0
        %437 = vmatprep.subr.mxu0 0.0
        %438 = vmatpush1.xpose.msra.mxu0 0.0
        %439 = vmatprep.mubr.f32.mxu0 0.0
        %440 = vmatmul.mubr.f32.gmra.mrb[0].mxu0 %v370
        %v441 = vpop.f32.mrb[0].mxu0
        %v442 = vadd.f32 0.0, %v441
        %v443 = vpop.f32.mrb[0].mxu0
        %444 = vdwg.mxu0
        %v445 = vlaneseq
        %v446 = vshrl.u32 %v445, 7
        %v447 = vlaneseq
        %v448 = vand.u32 %v447, 127
        %vm449 = vcmp.le.s32.totalorder %v448, %v446
        %v450 = vsel %vm449, %v442, -inf
        %vm451 = vcmask 64512
        %v452 = vsel %vm451, %v450, -inf
        %453 = vmax.xlane.f32.xlu0 %v452
        %v454 = vpop.xlane.xlu0 %453
        %v455 = vsub.f32 %v450, %v454
        %v456 = vmul.f32 %v455, 1.442695
        %v457 = vpow.pop %v456
        %v458 = vsel %vm451, %v457, 0.0
        %459 = vadd.xlane.f32.xlu0 %v458
        %v460 = vpop.xlane.xlu0 %459
        %v461 = vrcp.pop %v460
        %v462 = vmul.f32 %v457, %v461
        %v464 = vsel %vm451, %v462, 0
        %466 = vmatprep.subr.mxu0 0.0
        %467 = vmatpush1.msra.mxu0 %v365
        %468 = vmatprep.subr.mxu0 0.0
        %469 = vmatpush1.msra.mxu0 0.0
        %470 = vmatprep.subr.mxu0 0.0
        %471 = vmatpush1.msra.mxu0 0.0
        %472 = vmatprep.subr.mxu0 0.0
        %473 = vmatpush1.msra.mxu0 0.0
        %474 = vmatprep.subr.mxu0 0.0
        %475 = vmatpush1.msra.mxu0 0.0
        %476 = vmatprep.subr.mxu0 0.0
        %477 = vmatpush1.msra.mxu0 0.0
        %478 = vmatprep.subr.mxu0 0.0
        %479 = vmatpush1.msra.mxu0 0.0
        %480 = vmatprep.subr.mxu0 0.0
        %481 = vmatpush1.msra.mxu0 0.0
        %482 = vmatprep.subr.mxu0 0.0
        %483 = vmatpush1.msra.mxu0 0.0
        %484 = vmatprep.subr.mxu0 0.0
        %485 = vmatpush1.msra.mxu0 0.0
        %486 = vmatprep.subr.mxu0 0.0
        %487 = vmatpush1.msra.mxu0 0.0
        %488 = vmatprep.subr.mxu0 0.0
        %489 = vmatpush1.msra.mxu0 0.0
        %490 = vmatprep.subr.mxu0 0.0
        %491 = vmatpush1.msra.mxu0 0.0
        %492 = vmatprep.subr.mxu0 0.0
        %493 = vmatpush1.msra.mxu0 0.0
        %494 = vmatprep.subr.mxu0 0.0
        %495 = vmatpush1.msra.mxu0 0.0
        %496 = vmatprep.subr.mxu0 0.0
        %497 = vmatpush1.msra.mxu0 0.0
        %498 = vmatprep.subr.mxu0 0.0
        %499 = vmatpush1.msra.mxu0 0.0
        %500 = vmatprep.subr.mxu0 0.0
        %501 = vmatpush1.msra.mxu0 0.0
        %502 = vmatprep.subr.mxu0 0.0
        %503 = vmatpush1.msra.mxu0 0.0
        %504 = vmatprep.subr.mxu0 0.0
        %505 = vmatpush1.msra.mxu0 0.0
        %506 = vmatprep.subr.mxu0 0.0
        %507 = vmatpush1.msra.mxu0 0.0
        %508 = vmatprep.subr.mxu0 0.0
        %509 = vmatpush1.msra.mxu0 0.0
        %510 = vmatprep.subr.mxu0 0.0
        %511 = vmatpush1.msra.mxu0 0.0
        %512 = vmatprep.subr.mxu0 0.0
        %513 = vmatpush1.msra.mxu0 0.0
        %514 = vmatprep.subr.mxu0 0.0
        %515 = vmatpush1.msra.mxu0 0.0
        %516 = vmatprep.subr.mxu0 0.0
        %517 = vmatpush1.msra.mxu0 0.0
        %518 = vmatprep.subr.mxu0 0.0
        %519 = vmatpush1.msra.mxu0 0.0
        %520 = vmatprep.subr.mxu0 0.0
        %521 = vmatpush1.msra.mxu0 0.0
        %522 = vmatprep.subr.mxu0 0.0
        %523 = vmatpush1.msra.mxu0 0.0
        %524 = vmatprep.subr.mxu0 0.0
        %525 = vmatpush1.msra.mxu0 0.0
        %526 = vmatprep.subr.mxu0 0.0
        %527 = vmatpush1.msra.mxu0 0.0
        %528 = vmatprep.subr.mxu0 0.0
        %529 = vmatpush1.msra.mxu0 0.0
        %530 = vmatprep.mubr.f32.mxu0 0.0
        %531 = vmatmul.mubr.f32.gmra.mrb[0].mxu0 %v464
        %v532 = vpop.f32.mrb[0].mxu0
        %v533 = vadd.f32 0.0, %v532
        %v534 = vpop.f32.mrb[0].mxu0
        %535 = vdwg.mxu0
        %536 = vst.msk [vmem:[%s134] sm:$0xff] %vm368, %v533
        %s537 = sand.u32 %s71, 1
        %s538 = scalar_lea.sflag [#allocation3], %s537
        %s539 = sand.u32 %s71, 1
        %s540 = smul.addr %s539, 8
        %s541 = scalar_lea.vmem [#allocation2], %s540
        // Predicated region
        $region29: #{tpu_custom_call.1} parent=27 // pred_check
          %p542 = pneg %p81
        $region30: #{tpu_custom_call.1} parent=27 // pred_check_branch
          %544 = sbr.rel (%p542) target = $region32
        $region31: #{tpu_custom_call.1} parent=27 // pred_region
          %s546 = ssub.s32 128, 128
          %547 = vsyncadd %s538, %s546
          %s548 = smul.addr %s16, 128
          %s549 = scalar_lea.hbm %s2, %s548
          %s551 = sshll.u32 %s541, 4
          %s552 = int_to_ptr.vmem [resolvable:$true] %s551
          %554 = dma.vmem_to_hbm [thread:$0]  %s552, 128, %s549, %s538
        $region32: #{tpu_custom_call.1} parent=27 // pred_fallthru
          _
      $region28: #{tpu_custom_call.1} parent=5 // pred_fallthru
        _
      %p555 = scmp.le.s32.totalorder 2, %s11
      // Predicated region
      $region33: #{tpu_custom_call.1} parent=5 // pred_check
        %p556 = pneg %p555
      $region34: #{tpu_custom_call.1} parent=5 // pred_check_branch
        %558 = sbr.rel (%p556) target = $region36
      $region35: #{tpu_custom_call.1} parent=5 // pred_region
        %s559 = ssub.s32 %s11, 2
        // Predicated region
        $region37: #{tpu_custom_call.1} parent=35 // pred_check
          %p560 = pneg %p87
        $region38: #{tpu_custom_call.1} parent=35 // pred_check_branch
          %562 = sbr.rel (%p560) target = $region40
        $region39: #{tpu_custom_call.1} parent=35 // pred_region
          %s563 = sand.u32 %s72, 1
          %s564 = scalar_lea.sflag [#allocation3], %s563
          %s565 = sand.u32 %s72, 1
          %s566 = smul.addr %s565, 8
          %s567 = scalar_lea.vmem [#allocation2], %s566
          %568 = dma.done %s564, 128
        $region40: #{tpu_custom_call.1} parent=35 // pred_fallthru
          _
      $region36: #{tpu_custom_call.1} parent=5 // pred_fallthru
        _
    $region6: #{tpu_custom_call.1} parent=1 // loop_footer
      %s15 = sadd.s32 1, %s11
    $region7: #{tpu_custom_call.1} parent=1 // loop_footer_branch
      %10 = sbr.rel target = $region3
    $region8: #{tpu_custom_call.1} parent=1 // loop_exit
      _
    %569 = vsyncpa [#allocation3], 1
    %s570 = scalar_lea.sflag [#allocation3], 1
    %571 = vsyncpa %s570, 1

</llo_original>
